<compile_context>
chip_gen: v5e
topology: v5e:2x2
jax: 0.10.0
libtpu: 0.0.40
codegen_flags: <defaults>
</compile_context>

<pallas_src>
import math

import jax
import jax.numpy as jnp
from jax.experimental import pallas as pl
from jax.experimental.pallas import tpu as pltpu


# ---------------------------------------------------------------------------
# Zero-copy path: output aliases the input, kernel body moves no bytes.
# ---------------------------------------------------------------------------
def _noop_alias_kernel(x_ref, o_ref):
    del x_ref
    # Fake read/write dependency on the aliased output; no data movement.
    pltpu.touch(o_ref)


def _identity_alias(x):
    return pl.pallas_call(
        _noop_alias_kernel,
        out_shape=jax.ShapeDtypeStruct(x.shape, x.dtype),
        in_specs=[pl.BlockSpec(memory_space=pl.ANY)],
        out_specs=pl.BlockSpec(memory_space=pl.ANY),
        input_output_aliases={0: 0},   # output 0 reuses input 0's buffer
    )(x)


# ---------------------------------------------------------------------------
# Physical-copy path: one whole-array HBM->HBM DMA (no grid, no VMEM staging,
# no 128-alignment requirement, no ragged head/tail handling needed).
# ---------------------------------------------------------------------------
def _dma_copy_kernel(x_hbm, o_hbm, sem):
    cp = pltpu.make_async_copy(x_hbm, o_hbm, sem)
    cp.start()
    cp.wait()


def _identity_dma_copy(x):
    itemsize = jnp.dtype(x.dtype).itemsize
    return pl.pallas_call(
        _dma_copy_kernel,
        out_shape=jax.ShapeDtypeStruct(x.shape, x.dtype),
        in_specs=[pl.BlockSpec(memory_space=pl.ANY)],
        out_specs=pl.BlockSpec(memory_space=pl.ANY),
        scratch_shapes=[pltpu.SemaphoreType.DMA(())],
        cost_estimate=pl.CostEstimate(
            flops=0, transcendentals=0,
            bytes_accessed=2 * x.size * itemsize),
    )(x)


_ZERO_COPY_OK = None    # lazily probed once per process


def _identity_passthrough(x):
    """Route `x` through a Pallas kernel without changing its contents."""
    global _ZERO_COPY_OK
    if x.size == 0:
        return x
    if _ZERO_COPY_OK is None:
        # One-time probe with a tiny concrete array so the routing decision is
        # made exactly once and never taken under tracing.
        try:
            probe = jnp.zeros((8, 128), jnp.float32)
            jax.block_until_ready(_identity_alias(probe))
            _ZERO_COPY_OK = True
        except Exception:
            _ZERO_COPY_OK = False
    if _ZERO_COPY_OK:
        return _identity_alias(x)      # 0 bytes moved
    return _identity_dma_copy(x)       # single HBM->HBM DMA


# ---------------------------------------------------------------------------
# torch.view-style shape resolution (supports a single -1).
# ---------------------------------------------------------------------------
def _resolve_shape(shape, total):
    if len(shape) == 1 and isinstance(shape[0], (tuple, list)):
        shape = tuple(shape[0])
    shape = tuple(int(s) for s in shape)
    if shape.count(-1) > 1:
        raise ValueError("only one dimension can be inferred")
    if -1 in shape:
        known = 1
        for s in shape:
            if s != -1:
                known *= s
        if known == 0 or total % known != 0:
            raise ValueError(f"cannot reshape {total} elements into {shape}")
        shape = tuple(total // known if s == -1 else s for s in shape)
    if math.prod(shape) != total:
        raise ValueError(f"cannot reshape {total} elements into {shape}")
    return shape


class Reshape:
    """JAX/Pallas equivalent of the PyTorch Reshape module: x.view(self.shape).

    The Pallas kernel is a zero-byte aliased pass-through (matching torch
    .view aliasing semantics); the shape change itself is metadata-only.
    """

    def __init__(self, *args):
        self.shape = args

    def __call__(self, x):
        target = _resolve_shape(self.shape, x.size)
        y = _identity_passthrough(x)
        return jnp.reshape(y, target)   # row-major, same as torch .view


if __name__ == "__main__":
    key = jax.random.PRNGKey(0)

    # 1) Primary VIBI usage: NCHW feature map -> (batch, -1).
    x = jax.random.normal(key, (2, 4, 16, 16), dtype=jnp.float32)
    exp1 = jax.device_get(x).reshape(2, -1)       # host snapshot of reference
    y = Reshape(2, -1)(x)
    jax.block_until_ready(y)
    assert y.shape == (2, 4 * 16 * 16), y.shape
    assert y.dtype == x.dtype
    assert bool(jnp.array_equal(y, jnp.asarray(exp1)))

    # 2) bf16 input with -1 in the leading position.
    xb = jax.random.normal(jax.random.PRNGKey(1), (2, 4, 16, 16),
                           dtype=jnp.bfloat16)
    exp2 = jax.device_get(xb).reshape(-1, 16 * 16)
    yb = Reshape(-1, 16 * 16)(xb)
    jax.block_until_ready(yb)
    assert yb.shape == (8, 256)
    assert bool(jnp.array_equal(yb, jnp.asarray(exp2)))

    # 3) Ragged element count (not a multiple of 128) -> flatten.
    xs = jax.random.normal(jax.random.PRNGKey(2), (3, 5, 7), dtype=jnp.float32)
    exp3 = jax.device_get(xs).reshape(-1)
    ys = Reshape(-1)(xs)
    jax.block_until_ready(ys)
    assert ys.shape == (105,)
    assert bool(jnp.array_equal(ys, jnp.asarray(exp3)))

    # 4) Explicit physical-copy kernel (whole-ref HBM->HBM DMA) is bit-exact.
    yc = _identity_dma_copy(x)
    jax.block_until_ready(yc)
    assert bool(jnp.array_equal(yc.reshape(2, -1), jnp.asarray(exp1)))

    print("KERNEL_OK")
</pallas_src>

<mosaic_0001>
module attributes {stable_mosaic.version = 11 : i64} {
  func.func @_noop_alias_kernel(%arg0: memref<8x128xf32, #tpu.memory_space<any>>, %arg1: memref<8x128xf32, #tpu.memory_space<any>>) attributes {dimension_semantics = [], scalar_prefetch = 0 : i64, scratch_operands = 0 : i64, tpu.core_type = #tpu.core_type<tc>} {
    return
  }
}

module attributes {stable_mosaic.version = 11 : i64} {
  func.func @_dma_copy_kernel(%arg0: memref<2x4x16x16xf32, #tpu.memory_space<any>>, %arg1: memref<2x4x16x16xf32, #tpu.memory_space<any>>, %arg2: memref<!tpu.dma_semaphore, #tpu.memory_space<semaphore_mem>>) attributes {dimension_semantics = [], scalar_prefetch = 0 : i64, scratch_operands = 1 : i64, tpu.core_type = #tpu.core_type<tc>} {
    tpu.enqueue_dma source(%arg0 : memref<2x4x16x16xf32, #tpu.memory_space<any>>) target(%arg1 : memref<2x4x16x16xf32, #tpu.memory_space<any>>) target_semaphore(%arg2 : memref<!tpu.dma_semaphore, #tpu.memory_space<semaphore_mem>>)
    tpu.wait_dma2 semaphore(%arg2 : memref<!tpu.dma_semaphore, #tpu.memory_space<semaphore_mem>>) src(%arg0 : memref<2x4x16x16xf32, #tpu.memory_space<any>>) dst(%arg1 : memref<2x4x16x16xf32, #tpu.memory_space<any>>)
    return
  }
}

</mosaic_0001>

<llo_original>
// kernel: tpu_custom_call.1
$region0: #{tpu_custom_call.1}
  #allocation0 [shape = 'u32[]', space=smem, size = 0x4, offset = 0x4, fixed_abs, tag = 'smem constant byte address 0x4 - core index']
  #allocation1 [shape = 'u32[72,128]{1,0:T(1,128)}', space=vmem, size = 0x9000, scoped, tag = 'internal scratch']
  %s0 = inlined_call_operand.hbm [shape: f32[8,128], index: 0, kind: input, shape index: {}, may-alias: {0,1}]
  %s1 = inlined_call_operand.hbm [shape: f32[8,128], index: 1, kind: output, shape index: {}, may-alias: {0,1}]
  %s2 = sld [smem:[#allocation0]]
  $region2: #{tpu_custom_call.1} parent=0
    _
  %s4 = ssub.s32 1, %s2
  %s5 = scalar_select 0, %s4, %s2

// kernel: tpu_custom_call.1
$region0: #{tpu_custom_call.1}
  #allocation0 [shape = 'u32[]', space=smem, size = 0x4, offset = 0x4, fixed_abs, tag = 'smem constant byte address 0x4 - core index']
  #allocation1 [shape = 'u32[72,128]{1,0:T(1,128)}', space=vmem, size = 0x9000, scoped, tag = 'internal scratch']
  #allocation2 [shape = 's32[1]{0}', space=sflag, size = 0x4, scoped, tag = 'scratch operand']
  #allocation3 [shape = 's32[]', space=sflag, size = 0x4, offset = 0, fixed_abs, tag = 'sflag constant byte address 0x0 - dummy sync flag']
  #allocation4 [shape = 'u32[0]{0}', space=smem, size = 0, offset = 0, fixed_abs, tag = 'smem constant byte address 0x0 - null']
  %s0 = inlined_call_operand.hbm [shape: f32[2,4,16,16], index: 0, kind: input, shape index: {}]
  %s1 = inlined_call_operand.hbm [shape: f32[2,4,16,16], index: 1, kind: output, shape index: {}]
  %s2 = sld [smem:[#allocation0]]
  $region2: #{tpu_custom_call.1} parent=0
    _
  %s4 = ssub.s32 1, %s2
  %s5 = scalar_select 0, %s4, %s2
  %s7 = sshll.u32 1, 14
  %s8 = sxor.u32 4294967295, %s7
  %s10 = sshll.u32 %s0, 4
  %s11 = int_to_ptr.hbm [resolvable:$true] %s10
  %s12 = sshll.u32 %s1, 4
  %s13 = int_to_ptr.hbm [resolvable:$true] %s12
  %16 = dma.general %s11, 2048, %s13, [#allocation2], [#allocation3], [#allocation4], 0, 0
  %s17 = smul.u32 2, 4
  %s18 = smul.u32 %s17, 16
  %s19 = smul.u32 %s18, 1
  %s20 = sshll.u32 %s19, 4
  %21 = dma.done [#allocation2], %s20
  %22 = vsyncmov [#allocation2]
  %s23 = vpop.sfrf %22
  %p24 = scmp.eq.s32.totalorder %s23, 0
  %p25 = pneg %p24
  %27 = shalt.err (%p25)

</llo_original>
